<compile_context>
chip_gen: v7x
topology: tpu7x:2x2x1
jax: 0.10.0
libtpu: 0.0.40
codegen_flags: <defaults>
</compile_context>

<pallas_src>
import functools

import jax
import jax.numpy as jnp
from jax.experimental import pallas as pl
from jax.experimental.pallas import tpu as pltpu


def _attention_kernel(enc_ref, dec_ref, weT_ref, wdT_ref, bsum_ref, wf_ref,
                      awe_ref, alpha_ref, *, p_valid):
    """One batch tile of the attention forward pass.

    enc_ref:   (Bt, Pp, E)   encoder_out tile (pixel axis zero-padded to Pp)
    dec_ref:   (Bt, D)       decoder_hidden tile
    weT_ref:   (E, Ap)       encoder_att weight, pre-transposed & lane-padded
    wdT_ref:   (D, Ap)       decoder_att weight, pre-transposed & lane-padded
    bsum_ref:  (1, Ap) f32   be + bd folded into the per-row term
    wf_ref:    (1, Ap) f32   full_att weight row (padded columns are zero)
    awe_ref:   (Bt, E)       attention-weighted encoding (output)
    alpha_ref: (Bt, Pp) f32  attention weights (output, lane-dense)
    """
    bt, p_pad, e_dim = enc_ref.shape
    a_pad = weT_ref.shape[1]

    enc = enc_ref[...]            # (Bt, Pp, E) in the MXU compute dtype
    dec = dec_ref[...]            # (Bt, D)

    # att1 = encoder_att(encoder_out): one tall 2D MXU matmul, f32 accumulate.
    att1 = jnp.dot(enc.reshape(bt * p_pad, e_dim), weT_ref[...],
                   preferred_element_type=jnp.float32).reshape(bt, p_pad, a_pad)

    # att2 = decoder_att(decoder_hidden) + (be + bd): encoder bias folded into
    # the small (Bt, Ap) term instead of a (Bt, Pp, Ap) broadcast-add.
    att2 = jnp.dot(dec, wdT_ref[...],
                   preferred_element_type=jnp.float32) + bsum_ref[0, :]

    h = jnp.maximum(att1 + att2[:, None, :], 0.0)        # (Bt, Pp, Ap) f32

    # full_att (out_features == 1): VPU multiply + lane reduce instead of an
    # N=1 MXU matmul.  The full_att bias is dropped: it cancels exactly in the
    # softmax, so neither returned tensor depends on it.
    att = jnp.sum(h * wf_ref[0, :], axis=-1)             # (Bt, Pp) f32

    # Mask padded pixel positions so they receive zero attention weight.
    if p_pad != p_valid:
        pix = jax.lax.broadcasted_iota(jnp.int32, (bt, p_pad), 1)
        att = jnp.where(pix < p_valid, att, -jnp.inf)

    # Softmax over the pixel axis (lane reduce), f32 throughout; denominator
    # uses the EUP approximate reciprocal (separate issue slot, ~free).
    att_max = jnp.max(att, axis=-1, keepdims=True)
    p = jnp.exp(att - att_max)
    denom = jnp.sum(p, axis=-1, keepdims=True)
    alpha = p * pl.reciprocal(denom, approx=True)        # (Bt, Pp) f32

    # attention_weighted_encoding on the (otherwise idle) MXU: batched
    # (Bt,1,Pp) @ (Bt,Pp,E) -> (Bt,1,E) contraction over the pixel axis.
    # Avoids the (Bt,Pp,E) f32 elementwise product that dominated the VPU.
    awe = jax.lax.dot_general(
        alpha.astype(enc.dtype)[:, None, :], enc,
        dimension_numbers=(((2,), (1,)), ((0,), (0,))),
        preferred_element_type=jnp.float32)              # (Bt, 1, E) f32

    awe_ref[...] = awe[:, 0, :].astype(awe_ref.dtype)
    alpha_ref[...] = alpha.astype(alpha_ref.dtype)


def _vmem_budget_and_limit():
    """Generation-aware VMEM budgeting (128 MiB on v5e/v6e, 64 MiB on v7x)."""
    try:
        info = pltpu.get_tpu_info()
        phys = int(getattr(info, "vmem_capacity_bytes", 0)) or (64 << 20)
    except Exception:  # conservative fallback if the query is unavailable
        phys = 64 << 20
    limit = min(phys // 2, 100 << 20)   # scoped-VMEM limit requested from Mosaic
    budget = (3 * limit) // 4           # headroom for compiler-internal scratch
    return budget, limit


def _pick_batch_tile(batch, per_row_bytes, fixed_bytes, budget_bytes,
                     prefer_two_steps=True):
    """Pick a batch tile that fits the VMEM budget while keeping >= 2 grid
    steps for large batches (so v7x's second TensorCore gets work)."""
    avail = max(budget_bytes - fixed_bytes, 1)
    max_rows = max(int(avail // max(per_row_bytes, 1)), 1)
    want_split = prefer_two_steps and batch >= 16
    if max_rows >= batch and not want_split:
        return batch                       # single grid step, blocks == arrays
    bt = min(max_rows, batch)
    if want_split:
        bt = min(bt, (batch + 1) // 2)
    # Multi-step grids need the batch tile (a sublane dim of the 2-D blocks)
    # to be a multiple of 8.  Never fall back to the full batch when a single
    # tile is over budget; clamp to an 8-row tile instead.
    # TODO(synk): if even an 8-row tile overflows VMEM (huge P*E), chunk the
    # pixel axis in-kernel with an online softmax + chunked awe accumulation.
    bt = max((bt // 8) * 8, 8)
    return batch if bt >= batch else bt


def attention_forward(encoder_out, decoder_hidden, params, *,
                      batch_tile=None, mxu_dtype=None):
    """Attention forward pass as a single batch-tiled Pallas call.

    mxu_dtype: optional dtype (e.g. jnp.bfloat16) for the MXU operands
      (encoder_out / decoder_hidden / weight matrices).  Softmax and all VPU
      intermediates stay f32 (v5e has no bf16 VALU).  Default: input dtype.
    """
    batch, num_pixels, e_dim = encoder_out.shape
    d_dim = decoder_hidden.shape[1]
    a_dim = params["we"].shape[0]
    out_dtype = encoder_out.dtype
    compute_dtype = (jnp.dtype(mxu_dtype) if mxu_dtype is not None
                     else jnp.dtype(out_dtype))

    # Lane-dense padding: pixel axis (alpha output / softmax lanes) and the
    # attention dim (att1 / h lanes, MXU output tiles) up to multiples of 128.
    p_pad = ((num_pixels + 127) // 128) * 128
    a_pad = ((a_dim + 127) // 128) * 128

    enc_in = encoder_out
    if p_pad != num_pixels:
        enc_in = jnp.pad(enc_in, ((0, 0), (0, p_pad - num_pixels), (0, 0)))

    # Pre-transpose / pad weights once (x @ W layout for the kernel).  Zero wf
    # columns make the attention-dim padding mathematically inert.
    weT = params["we"].T                                  # (E, A)
    wdT = params["wd"].T                                  # (D, A)
    be, bd, wf = params["be"], params["bd"], params["wf"].reshape(-1)
    if a_pad != a_dim:
        pad_a = a_pad - a_dim
        weT = jnp.pad(weT, ((0, 0), (0, pad_a)))
        wdT = jnp.pad(wdT, ((0, 0), (0, pad_a)))
        be = jnp.pad(be, (0, pad_a))
        bd = jnp.pad(bd, (0, pad_a))
        wf = jnp.pad(wf, (0, pad_a))
    bsum = (be + bd).reshape(1, a_pad).astype(jnp.float32)
    wf = wf.reshape(1, a_pad).astype(jnp.float32)
    # NOTE: params["bf"] (full_att bias) cancels through the softmax and never
    # enters the kernel.

    enc_in = enc_in.astype(compute_dtype)
    dec_in = decoder_hidden.astype(compute_dtype)
    weT = weT.astype(compute_dtype)
    wdT = wdT.astype(compute_dtype)

    # VMEM accounting (double-buffered blocks + live f32 intermediates).
    c_sz = jnp.dtype(compute_dtype).itemsize
    budget, vmem_limit = _vmem_budget_and_limit()
    per_row = (2 * p_pad * e_dim * c_sz          # enc block (x2 pipeline bufs)
               + 2 * d_dim * c_sz                # dec block
               + 3 * p_pad * a_pad * 4           # att1 / h f32 intermediates
               + 2 * (e_dim + p_pad) * 4         # awe / alpha output buffers
               + 6 * p_pad * 4)                  # softmax row temporaries
    fixed = (2 * (e_dim + d_dim) * a_pad * c_sz  # resident weights (x2 bufs)
             + 4 * a_pad * 4)                    # bsum / wf
    if batch_tile is not None:
        bt = batch if batch_tile >= batch else max((batch_tile // 8) * 8, 8)
    else:
        bt = _pick_batch_tile(batch, per_row, fixed, budget)

    # Pad the batch so every grid step gets a full tile: no silent truncation
    # for tile sizes that do not divide the batch.
    b_pad = pl.cdiv(batch, bt) * bt
    if b_pad != batch:
        enc_in = jnp.pad(enc_in, ((0, b_pad - batch), (0, 0), (0, 0)))
        dec_in = jnp.pad(dec_in, ((0, b_pad - batch), (0, 0)))
    grid = (b_pad // bt,)

    kernel = functools.partial(_attention_kernel, p_valid=num_pixels)

    # Weight BlockSpecs use constant index_maps, so they are fetched once and
    # stay VMEM-resident.  (pipeline_mode=pl.Buffered(1) would also drop their
    # second VMEM buffer on v7x; left at the default for portability.)
    awe, alpha = pl.pallas_call(
        kernel,
        grid=grid,
        in_specs=[
            pl.BlockSpec((bt, p_pad, e_dim), lambda b: (b, 0, 0)),   # enc tile
            pl.BlockSpec((bt, d_dim), lambda b: (b, 0)),             # dec tile
            pl.BlockSpec((e_dim, a_pad), lambda b: (0, 0)),          # weT
            pl.BlockSpec((d_dim, a_pad), lambda b: (0, 0)),          # wdT
            pl.BlockSpec((1, a_pad), lambda b: (0, 0)),              # be + bd
            pl.BlockSpec((1, a_pad), lambda b: (0, 0)),              # wf
        ],
        out_specs=(
            pl.BlockSpec((bt, e_dim), lambda b: (b, 0)),
            pl.BlockSpec((bt, p_pad), lambda b: (b, 0)),
        ),
        out_shape=(
            jax.ShapeDtypeStruct((b_pad, e_dim), out_dtype),
            jax.ShapeDtypeStruct((b_pad, p_pad), jnp.float32),  # alpha kept f32
        ),
        compiler_params=pltpu.CompilerParams(
            dimension_semantics=("parallel",),
            vmem_limit_bytes=int(vmem_limit),
        ),
    )(enc_in, dec_in, weT, wdT, bsum, wf)

    return awe[:batch], alpha[:batch, :num_pixels]


def init_params(key, encoder_dim, decoder_dim, attention_dim):
    """Deterministic parameter init (PyTorch Linear shape conventions)."""
    k1, k2, k3, k4, k5, k6 = jax.random.split(key, 6)
    scale = 0.05
    return {
        "we": scale * jax.random.normal(k1, (attention_dim, encoder_dim), jnp.float32),
        "be": scale * jax.random.normal(k2, (attention_dim,), jnp.float32),
        "wd": scale * jax.random.normal(k3, (attention_dim, decoder_dim), jnp.float32),
        "bd": scale * jax.random.normal(k4, (attention_dim,), jnp.float32),
        "wf": scale * jax.random.normal(k5, (1, attention_dim), jnp.float32),
        "bf": scale * jax.random.normal(k6, (1,), jnp.float32),
    }


def _reference_forward(encoder_out, decoder_hidden, params):
    """Pure-JAX reference mirroring the PyTorch module, for sanity checking."""
    att1 = encoder_out @ params["we"].T + params["be"]
    att2 = decoder_hidden @ params["wd"].T + params["bd"]
    h = jnp.maximum(att1 + att2[:, None, :], 0.0)
    att = jnp.squeeze(h @ params["wf"].T + params["bf"], axis=2)
    alpha = jax.nn.softmax(att, axis=1)
    awe = jnp.sum(encoder_out * alpha[:, :, None], axis=1)
    return awe, alpha


if __name__ == "__main__":
    B, P = 2, 16                 # batch, num_pixels
    encoder_dim, decoder_dim, attention_dim = 32, 32, 32

    key = jax.random.PRNGKey(0)
    k_enc, k_dec, k_par = jax.random.split(key, 3)

    encoder_out = jax.random.normal(k_enc, (B, P, encoder_dim), jnp.float32)
    decoder_hidden = jax.random.normal(k_dec, (B, decoder_dim), jnp.float32)
    params = init_params(k_par, encoder_dim, decoder_dim, attention_dim)

    awe_ref, alpha_ref = _reference_forward(encoder_out, decoder_hidden, params)

    # Default path: MXU fed in the input dtype (f32 here).
    awe, alpha = attention_forward(encoder_out, decoder_hidden, params)
    jax.block_until_ready((awe, alpha))
    assert awe.shape == (B, encoder_dim) and alpha.shape == (B, P)
    # Tolerance accounts for the EUP approximate reciprocal in the softmax.
    assert jnp.allclose(alpha, alpha_ref, atol=2e-3, rtol=2e-3)
    assert jnp.allclose(awe, awe_ref, atol=2e-3, rtol=2e-3)

    # Production-style path from the perf review: bf16 MXU operands, f32
    # softmax/accumulation.  Looser tolerance for the bf16 logits/encoding.
    awe_bf, alpha_bf = attention_forward(encoder_out, decoder_hidden, params,
                                         mxu_dtype=jnp.bfloat16)
    jax.block_until_ready((awe_bf, alpha_bf))
    assert jnp.allclose(alpha_bf, alpha_ref, atol=2e-2, rtol=2e-2)
    assert jnp.allclose(awe_bf, awe_ref, atol=2e-2, rtol=2e-2)

    print("KERNEL_OK")
</pallas_src>

<mosaic_0001>
module attributes {stable_mosaic.version = 11 : i64} {
  func.func @_attention_kernel(%arg0: i32, %arg1: memref<2x128x32xf32, #tpu.memory_space<vmem>>, %arg2: memref<2x32xf32, #tpu.memory_space<vmem>>, %arg3: memref<32x128xf32, #tpu.memory_space<vmem>>, %arg4: memref<32x128xf32, #tpu.memory_space<vmem>>, %arg5: memref<1x128xf32, #tpu.memory_space<vmem>>, %arg6: memref<1x128xf32, #tpu.memory_space<vmem>>, %arg7: memref<2x32xf32, #tpu.memory_space<vmem>>, %arg8: memref<2x128xf32, #tpu.memory_space<vmem>>) attributes {dimension_semantics = [#tpu.dimension_semantics<parallel>], iteration_bounds = array<i64: 1>, scalar_prefetch = 0 : i64, scratch_operands = 0 : i64, tpu.core_type = #tpu.core_type<tc>, window_params = [{transform_indices = @transform_0, window_bounds = array<i64: 2, 128, 32>}, {transform_indices = @transform_1, window_bounds = array<i64: 2, 32>}, {pipeline_mode = #tpu.pipeline_mode<synchronous>, transform_indices = @transform_2, window_bounds = array<i64: 32, 128>}, {pipeline_mode = #tpu.pipeline_mode<synchronous>, transform_indices = @transform_3, window_bounds = array<i64: 32, 128>}, {pipeline_mode = #tpu.pipeline_mode<synchronous>, transform_indices = @transform_4, window_bounds = array<i64: 1, 128>}, {pipeline_mode = #tpu.pipeline_mode<synchronous>, transform_indices = @transform_5, window_bounds = array<i64: 1, 128>}, {transform_indices = @transform_6, window_bounds = array<i64: 2, 32>}, {transform_indices = @transform_7, window_bounds = array<i64: 2, 128>}]} {
    %c0 = arith.constant 0 : index
    %c0_0 = arith.constant 0 : index
    %c0_1 = arith.constant 0 : index
    %0 = vector.load %arg1[%c0, %c0_0, %c0_1] : memref<2x128x32xf32, #tpu.memory_space<vmem>>, vector<2x128x32xf32>
    %c0_2 = arith.constant 0 : index
    %c0_3 = arith.constant 0 : index
    %1 = vector.load %arg2[%c0_2, %c0_3] : memref<2x32xf32, #tpu.memory_space<vmem>>, vector<2x32xf32>
    %2 = vector.shape_cast %0 : vector<2x128x32xf32> to vector<256x32xf32>
    %c0_4 = arith.constant 0 : index
    %c0_5 = arith.constant 0 : index
    %3 = vector.load %arg3[%c0_4, %c0_5] : memref<32x128xf32, #tpu.memory_space<vmem>>, vector<32x128xf32>
    %cst = arith.constant dense<0.000000e+00> : vector<256x128xf32>
    %4 = tpu.matmul %2, %3, %cst {dimension_numbers = #tpu.dot_dimension_numbers<[1], [0], [0], [1], [0, 0, 1, 1], [], []>} : vector<256x32xf32>, vector<32x128xf32>, vector<256x128xf32> -> vector<256x128xf32>
    %5 = vector.shape_cast %4 : vector<256x128xf32> to vector<2x128x128xf32>
    %c0_6 = arith.constant 0 : index
    %c0_7 = arith.constant 0 : index
    %6 = vector.load %arg4[%c0_6, %c0_7] : memref<32x128xf32, #tpu.memory_space<vmem>>, vector<32x128xf32>
    %cst_8 = arith.constant dense<0.000000e+00> : vector<2x128xf32>
    %7 = tpu.matmul %1, %6, %cst_8 {dimension_numbers = #tpu.dot_dimension_numbers<[1], [0], [0], [1], [0, 0, 1, 1], [], []>} : vector<2x32xf32>, vector<32x128xf32>, vector<2x128xf32> -> vector<2x128xf32>
    %c0_9 = arith.constant 0 : index
    %c0_10 = arith.constant 0 : index
    %8 = vector.load %arg5[%c0_9, %c0_10] : memref<1x128xf32, #tpu.memory_space<vmem>>, vector<1x128xf32>
    %9 = vector.shape_cast %8 : vector<1x128xf32> to vector<128xf32>
    %10 = vector.shape_cast %9 : vector<128xf32> to vector<1x128xf32>
    %11 = vector.broadcast %10 : vector<1x128xf32> to vector<2x128xf32>
    %12 = arith.addf %7, %11 : vector<2x128xf32>
    %13 = vector.shape_cast %12 : vector<2x128xf32> to vector<2x1x128xf32>
    %14 = vector.broadcast %13 : vector<2x1x128xf32> to vector<2x128x128xf32>
    %15 = arith.addf %5, %14 : vector<2x128x128xf32>
    %cst_11 = arith.constant 0.000000e+00 : f32
    %16 = vector.broadcast %cst_11 : f32 to vector<2x128x128xf32>
    %17 = arith.maximumf %15, %16 : vector<2x128x128xf32>
    %c0_12 = arith.constant 0 : index
    %c0_13 = arith.constant 0 : index
    %18 = vector.load %arg6[%c0_12, %c0_13] : memref<1x128xf32, #tpu.memory_space<vmem>>, vector<1x128xf32>
    %19 = vector.shape_cast %18 : vector<1x128xf32> to vector<128xf32>
    %20 = vector.shape_cast %19 : vector<128xf32> to vector<1x1x128xf32>
    %21 = vector.broadcast %20 : vector<1x1x128xf32> to vector<2x128x128xf32>
    %22 = arith.mulf %17, %21 : vector<2x128x128xf32>
    %cst_14 = arith.constant dense<0.000000e+00> : vector<2x128xf32>
    %23 = vector.multi_reduction <add>, %22, %cst_14 [2] : vector<2x128x128xf32> to vector<2x128xf32>
    %24 = tpu.iota {dimensions = array<i32: 1>} : vector<2x128xi32>
    %c16_i32 = arith.constant 16 : i32
    %25 = vector.broadcast %c16_i32 : i32 to vector<2x128xi32>
    %26 = arith.cmpi slt, %24, %25 : vector<2x128xi32>
    %cst_15 = arith.constant 0xFF800000 : f32
    %27 = vector.broadcast %cst_15 : f32 to vector<2x128xf32>
    %28 = arith.select %26, %23, %27 : vector<2x128xi1>, vector<2x128xf32>
    %cst_16 = arith.constant dense<0xFF800000> : vector<2xf32>
    %29 = vector.multi_reduction <maximumf>, %28, %cst_16 [1] : vector<2x128xf32> to vector<2xf32>
    %30 = vector.shape_cast %29 : vector<2xf32> to vector<2x1xf32>
    %31 = vector.broadcast %30 : vector<2x1xf32> to vector<2x128xf32>
    %32 = arith.subf %28, %31 : vector<2x128xf32>
    %33 = math.exp %32 : vector<2x128xf32>
    %cst_17 = arith.constant dense<0.000000e+00> : vector<2xf32>
    %34 = vector.multi_reduction <add>, %33, %cst_17 [1] : vector<2x128xf32> to vector<2xf32>
    %35 = vector.shape_cast %34 : vector<2xf32> to vector<2x1xf32>
    %36 = tpu.reciprocal %35 {approx = true} : vector<2x1xf32> -> vector<2x1xf32>
    %37 = vector.broadcast %36 : vector<2x1xf32> to vector<2x128xf32>
    %38 = arith.mulf %33, %37 : vector<2x128xf32>
    %39 = vector.shape_cast %38 : vector<2x128xf32> to vector<2x1x128xf32>
    %cst_18 = arith.constant dense<0.000000e+00> : vector<2x1x32xf32>
    %40 = tpu.matmul %39, %0, %cst_18 {dimension_numbers = #tpu.dot_dimension_numbers<[2], [1], [1], [2], [0, 0, 0, 1, 1, 2], [0], [0]>} : vector<2x1x128xf32>, vector<2x128x32xf32>, vector<2x1x32xf32> -> vector<2x1x32xf32>
    %41 = vector.shape_cast %40 : vector<2x1x32xf32> to vector<2x32xf32>
    %c0_19 = arith.constant 0 : index
    %c0_20 = arith.constant 0 : index
    %42 = vector.load %arg7[%c0_19, %c0_20] : memref<2x32xf32, #tpu.memory_space<vmem>>, vector<2x32xf32>
    tpu.vector_store %arg7[%c0_19, %c0_20], %41 {strides = array<i32>} : memref<2x32xf32, #tpu.memory_space<vmem>>, vector<2x32xf32>,
    %c0_21 = arith.constant 0 : index
    %c0_22 = arith.constant 0 : index
    %43 = vector.load %arg8[%c0_21, %c0_22] : memref<2x128xf32, #tpu.memory_space<vmem>>, vector<2x128xf32>
    tpu.vector_store %arg8[%c0_21, %c0_22], %38 {strides = array<i32>} : memref<2x128xf32, #tpu.memory_space<vmem>>, vector<2x128xf32>,
    return
  }
  func.func @transform_0(%arg0: i32) -> (i32, i32, i32) {
    %c0_i32 = arith.constant 0 : i32
    %c0_i32_0 = arith.constant 0 : i32
    %c0_i32_1 = arith.constant 0 : i32
    return %arg0, %c0_i32, %c0_i32_0 : i32, i32, i32
  }
  func.func @transform_1(%arg0: i32) -> (i32, i32) {
    %c0_i32 = arith.constant 0 : i32
    %c0_i32_0 = arith.constant 0 : i32
    return %arg0, %c0_i32 : i32, i32
  }
  func.func @transform_2(%arg0: i32) -> (i32, i32) {
    %c0_i32 = arith.constant 0 : i32
    %c0_i32_0 = arith.constant 0 : i32
    %c0_i32_1 = arith.constant 0 : i32
    return %c0_i32, %c0_i32_0 : i32, i32
  }
  func.func @transform_3(%arg0: i32) -> (i32, i32) {
    %c0_i32 = arith.constant 0 : i32
    %c0_i32_0 = arith.constant 0 : i32
    %c0_i32_1 = arith.constant 0 : i32
    return %c0_i32, %c0_i32_0 : i32, i32
  }
  func.func @transform_4(%arg0: i32) -> (i32, i32) {
    %c0_i32 = arith.constant 0 : i32
    %c0_i32_0 = arith.constant 0 : i32
    %c0_i32_1 = arith.constant 0 : i32
    return %c0_i32, %c0_i32_0 : i32, i32
  }
  func.func @transform_5(%arg0: i32) -> (i32, i32) {
    %c0_i32 = arith.constant 0 : i32
    %c0_i32_0 = arith.constant 0 : i32
    %c0_i32_1 = arith.constant 0 : i32
    return %c0_i32, %c0_i32_0 : i32, i32
  }
  func.func @transform_6(%arg0: i32) -> (i32, i32) {
    %c0_i32 = arith.constant 0 : i32
    %c0_i32_0 = arith.constant 0 : i32
    return %arg0, %c0_i32 : i32, i32
  }
  func.func @transform_7(%arg0: i32) -> (i32, i32) {
    %c0_i32 = arith.constant 0 : i32
    %c0_i32_0 = arith.constant 0 : i32
    return %arg0, %c0_i32 : i32, i32
  }
}

</mosaic_0001>

<llo_original>
// kernel: tpu_custom_call.1
$region0: #{tpu_custom_call.1}
  #allocation0 [shape = 'u32[]', space=smem, size = 0x4, offset = 0x4, fixed_abs, tag = 'smem constant byte address 0x4 - core index']
  #allocation1 [shape = 'u32[144,128]{1,0:T(1,128)}', space=vmem, size = 0x12000, scoped, tag = 'internal scratch']
  %s0 = inlined_call_operand.vmem [shape: f32[2,128,32], index: 0, kind: input, shape index: {}]
  %s1 = inlined_call_operand.vmem [shape: f32[2,32], index: 1, kind: input, shape index: {}]
  %s2 = inlined_call_operand.vmem [shape: f32[32,128], index: 2, kind: input, shape index: {}]
  %s3 = inlined_call_operand.vmem [shape: f32[32,128], index: 3, kind: input, shape index: {}]
  %s4 = inlined_call_operand.vmem [shape: f32[1,128], index: 4, kind: input, shape index: {}]
  %s5 = inlined_call_operand.vmem [shape: f32[1,128], index: 5, kind: input, shape index: {}]
  %s6 = inlined_call_operand.hbm [shape: f32[2,32], index: 6, kind: output, shape index: {0}]
  %s7 = inlined_call_operand.hbm [shape: f32[2,128], index: 7, kind: output, shape index: {1}]
  %8 = xla_tuple %s6, %s7
  %s9 = sld [smem:[#allocation0]]
  $region42: #{tpu_custom_call.1} parent=0
    _
  %s11 = ssub.s32 1, %s9
  %s12 = scalar_select 0, %s11, %s9
  $region1: #{tpu_custom_call.1} parent=0
    #allocation2 [shape = 'u8[1024]{0}', space=vmem, size = 0x400, scoped, tag = 'output window, operand 0, single buffered']
    #allocation3 [shape = 's32[1]{0}', space=sflag, size = 0x4, scoped, tag = 'scoped memory for tpu_custom_call.1']
    #allocation4 [shape = 'u8[1024]{0}', space=vmem, size = 0x400, scoped, tag = 'output window, operand 1, single buffered']
    #allocation5 [shape = 's32[1]{0}', space=sflag, size = 0x4, scoped, tag = 'scoped memory for tpu_custom_call.1']
    %13 = vsyncpa [#allocation3], 0
    %14 = vsyncpa [#allocation5], 0
    // Predicated region
    $region2: #{tpu_custom_call.1} parent=1 // pred_check
      _
    $region3: #{tpu_custom_call.1} parent=1 // pred_check_branch
      %16 = sbr.rel (0) target = $region5
    $region4: #{tpu_custom_call.1} parent=1 // pred_region
      _
    $region5: #{tpu_custom_call.1} parent=1 // pred_fallthru
      _
    // Predicated region
    $region6: #{tpu_custom_call.1} parent=1 // pred_check
      _
    $region7: #{tpu_custom_call.1} parent=1 // pred_check_branch
      %18 = sbr.rel (0) target = $region9
    $region8: #{tpu_custom_call.1} parent=1 // pred_region
      _
    $region9: #{tpu_custom_call.1} parent=1 // pred_fallthru
      _
    // Predicated region
    $region10: #{tpu_custom_call.1} parent=1 // pred_check
      _
    $region11: #{tpu_custom_call.1} parent=1 // pred_check_branch
      %20 = sbr.rel (0) target = $region13
    $region12: #{tpu_custom_call.1} parent=1 // pred_region
      _
    $region13: #{tpu_custom_call.1} parent=1 // pred_fallthru
      _
    // Predicated region
    $region14: #{tpu_custom_call.1} parent=1 // pred_check
      _
    $region15: #{tpu_custom_call.1} parent=1 // pred_check_branch
      %22 = sbr.rel (0) target = $region17
    $region16: #{tpu_custom_call.1} parent=1 // pred_region
      _
    $region17: #{tpu_custom_call.1} parent=1 // pred_fallthru
      _
    // Predicated region
    $region18: #{tpu_custom_call.1} parent=1 // pred_check
      _
    $region19: #{tpu_custom_call.1} parent=1 // pred_check_branch
      %24 = sbr.rel (0) target = $region21
    $region20: #{tpu_custom_call.1} parent=1 // pred_region
      _
    $region21: #{tpu_custom_call.1} parent=1 // pred_fallthru
      _
    // Predicated region
    $region22: #{tpu_custom_call.1} parent=1 // pred_check
      _
    $region23: #{tpu_custom_call.1} parent=1 // pred_check_branch
      %26 = sbr.rel (0) target = $region25
    $region24: #{tpu_custom_call.1} parent=1 // pred_region
      _
    $region25: #{tpu_custom_call.1} parent=1 // pred_fallthru
      _
    %v27 = vld [vmem:[%s0] sm:$0xff]
    %v28 = vld [vmem:[%s0 + $0x8] sm:$0xff]
    %v29 = vld [vmem:[%s0 + $0x10] sm:$0xff]
    %v30 = vld [vmem:[%s0 + $0x18] sm:$0xff]
    %v31 = vld [vmem:[%s0 + $0x20] sm:$0xff]
    %v32 = vld [vmem:[%s0 + $0x28] sm:$0xff]
    %v33 = vld [vmem:[%s0 + $0x30] sm:$0xff]
    %v34 = vld [vmem:[%s0 + $0x38] sm:$0xff]
    %v35 = vld [vmem:[%s0 + $0x40] sm:$0xff]
    %v36 = vld [vmem:[%s0 + $0x48] sm:$0xff]
    %v37 = vld [vmem:[%s0 + $0x50] sm:$0xff]
    %v38 = vld [vmem:[%s0 + $0x58] sm:$0xff]
    %v39 = vld [vmem:[%s0 + $0x60] sm:$0xff]
    %v40 = vld [vmem:[%s0 + $0x68] sm:$0xff]
    %v41 = vld [vmem:[%s0 + $0x70] sm:$0xff]
    %v42 = vld [vmem:[%s0 + $0x78] sm:$0xff]
    %v43 = vld [vmem:[%s0 + $0x80] sm:$0xff]
    %v44 = vld [vmem:[%s0 + $0x88] sm:$0xff]
    %v45 = vld [vmem:[%s0 + $0x90] sm:$0xff]
    %v46 = vld [vmem:[%s0 + $0x98] sm:$0xff]
    %v47 = vld [vmem:[%s0 + $0xa0] sm:$0xff]
    %v48 = vld [vmem:[%s0 + $0xa8] sm:$0xff]
    %v49 = vld [vmem:[%s0 + $0xb0] sm:$0xff]
    %v50 = vld [vmem:[%s0 + $0xb8] sm:$0xff]
    %v51 = vld [vmem:[%s0 + $0xc0] sm:$0xff]
    %v52 = vld [vmem:[%s0 + $0xc8] sm:$0xff]
    %v53 = vld [vmem:[%s0 + $0xd0] sm:$0xff]
    %v54 = vld [vmem:[%s0 + $0xd8] sm:$0xff]
    %v55 = vld [vmem:[%s0 + $0xe0] sm:$0xff]
    %v56 = vld [vmem:[%s0 + $0xe8] sm:$0xff]
    %v57 = vld [vmem:[%s0 + $0xf0] sm:$0xff]
    %v58 = vld [vmem:[%s0 + $0xf8] sm:$0xff]
    %v59 = vld [vmem:[%s1] sm:$0x3]
    %v60 = vld [vmem:[%s2] sm:$0xff]
    %v61 = vld [vmem:[%s2 + $0x8] sm:$0xff]
    %v62 = vld [vmem:[%s2 + $0x10] sm:$0xff]
    %v63 = vld [vmem:[%s2 + $0x18] sm:$0xff]
    %vm64 = vcmask 261120
    %v66 = vsel %vm64, %v27, 0
    %v69 = vsel %vm64, %v28, 0
    %v72 = vsel %vm64, %v29, 0
    %v75 = vsel %vm64, %v30, 0
    %v78 = vsel %vm64, %v31, 0
    %v81 = vsel %vm64, %v32, 0
    %v84 = vsel %vm64, %v33, 0
    %v87 = vsel %vm64, %v34, 0
    %v90 = vsel %vm64, %v35, 0
    %v93 = vsel %vm64, %v36, 0
    %v96 = vsel %vm64, %v37, 0
    %v99 = vsel %vm64, %v38, 0
    %v102 = vsel %vm64, %v39, 0
    %v105 = vsel %vm64, %v40, 0
    %v108 = vsel %vm64, %v41, 0
    %v111 = vsel %vm64, %v42, 0
    %v114 = vsel %vm64, %v43, 0
    %v117 = vsel %vm64, %v44, 0
    %v120 = vsel %vm64, %v45, 0
    %v123 = vsel %vm64, %v46, 0
    %v126 = vsel %vm64, %v47, 0
    %v129 = vsel %vm64, %v48, 0
    %v132 = vsel %vm64, %v49, 0
    %v135 = vsel %vm64, %v50, 0
    %v138 = vsel %vm64, %v51, 0
    %v141 = vsel %vm64, %v52, 0
    %v144 = vsel %vm64, %v53, 0
    %v147 = vsel %vm64, %v54, 0
    %v150 = vsel %vm64, %v55, 0
    %v153 = vsel %vm64, %v56, 0
    %v156 = vsel %vm64, %v57, 0
    %v159 = vsel %vm64, %v58, 0
    %161 = vmatprep.subr.mxu0 0.0
    %162 = vmatpush1.msra.mxu0 %v60
    %163 = vmatprep.subr.mxu0 0.0
    %164 = vmatpush1.msra.mxu0 %v61
    %165 = vmatprep.subr.mxu0 0.0
    %166 = vmatpush1.msra.mxu0 %v62
    %167 = vmatprep.subr.mxu0 0.0
    %168 = vmatpush1.msra.mxu0 %v63
    %169 = vmatprep.subr.mxu0 0.0
    %170 = vmatpush1.msra.mxu0 0.0
    %171 = vmatprep.subr.mxu0 0.0
    %172 = vmatpush1.msra.mxu0 0.0
    %173 = vmatprep.subr.mxu0 0.0
    %174 = vmatpush1.msra.mxu0 0.0
    %175 = vmatprep.subr.mxu0 0.0
    %176 = vmatpush1.msra.mxu0 0.0
    %177 = vmatprep.subr.mxu0 0.0
    %178 = vmatpush1.msra.mxu0 0.0
    %179 = vmatprep.subr.mxu0 0.0
    %180 = vmatpush1.msra.mxu0 0.0
    %181 = vmatprep.subr.mxu0 0.0
    %182 = vmatpush1.msra.mxu0 0.0
    %183 = vmatprep.subr.mxu0 0.0
    %184 = vmatpush1.msra.mxu0 0.0
    %185 = vmatprep.subr.mxu0 0.0
    %186 = vmatpush1.msra.mxu0 0.0
    %187 = vmatprep.subr.mxu0 0.0
    %188 = vmatpush1.msra.mxu0 0.0
    %189 = vmatprep.subr.mxu0 0.0
    %190 = vmatpush1.msra.mxu0 0.0
    %191 = vmatprep.subr.mxu0 0.0
    %192 = vmatpush1.msra.mxu0 0.0
    %193 = vmatprep.subr.mxu0 0.0
    %194 = vmatpush1.msra.mxu0 0.0
    %195 = vmatprep.subr.mxu0 0.0
    %196 = vmatpush1.msra.mxu0 0.0
    %197 = vmatprep.subr.mxu0 0.0
    %198 = vmatpush1.msra.mxu0 0.0
    %199 = vmatprep.subr.mxu0 0.0
    %200 = vmatpush1.msra.mxu0 0.0
    %201 = vmatprep.subr.mxu0 0.0
    %202 = vmatpush1.msra.mxu0 0.0
    %203 = vmatprep.subr.mxu0 0.0
    %204 = vmatpush1.msra.mxu0 0.0
    %205 = vmatprep.subr.mxu0 0.0
    %206 = vmatpush1.msra.mxu0 0.0
    %207 = vmatprep.subr.mxu0 0.0
    %208 = vmatpush1.msra.mxu0 0.0
    %209 = vmatprep.subr.mxu0 0.0
    %210 = vmatpush1.msra.mxu0 0.0
    %211 = vmatprep.subr.mxu0 0.0
    %212 = vmatpush1.msra.mxu0 0.0
    %213 = vmatprep.subr.mxu0 0.0
    %214 = vmatpush1.msra.mxu0 0.0
    %215 = vmatprep.subr.mxu0 0.0
    %216 = vmatpush1.msra.mxu0 0.0
    %217 = vmatprep.subr.mxu0 0.0
    %218 = vmatpush1.msra.mxu0 0.0
    %219 = vmatprep.subr.mxu0 0.0
    %220 = vmatpush1.msra.mxu0 0.0
    %221 = vmatprep.subr.mxu0 0.0
    %222 = vmatpush1.msra.mxu0 0.0
    %223 = vmatprep.subr.mxu0 0.0
    %224 = vmatpush1.msra.mxu0 0.0
    %225 = vmatprep.mubr.f32.mxu0 0.0
    %226 = vmatmul.mubr.f32.gmra.mrb[0].mxu0 %v66
    %v227 = vpop.f32.mrb[0].mxu0
    %v228 = vadd.f32 0.0, %v227
    %v229 = vpop.f32.mrb[0].mxu0
    %230 = vmatprep.mubr.f32.mxu0 0.0
    %231 = vmatmul.mubr.f32.gmra.mrb[0].mxu0 %v69
    %v232 = vpop.f32.mrb[0].mxu0
    %v233 = vadd.f32 0.0, %v232
    %v234 = vpop.f32.mrb[0].mxu0
    %235 = vmatprep.mubr.f32.mxu0 0.0
    %236 = vmatmul.mubr.f32.gmra.mrb[0].mxu0 %v72
    %v237 = vpop.f32.mrb[0].mxu0
    %v238 = vadd.f32 0.0, %v237
    %v239 = vpop.f32.mrb[0].mxu0
    %240 = vmatprep.mubr.f32.mxu0 0.0
    %241 = vmatmul.mubr.f32.gmra.mrb[0].mxu0 %v75
    %v242 = vpop.f32.mrb[0].mxu0
    %v243 = vadd.f32 0.0, %v242
    %v244 = vpop.f32.mrb[0].mxu0
    %245 = vmatprep.mubr.f32.mxu0 0.0
    %246 = vmatmul.mubr.f32.gmra.mrb[0].mxu0 %v78
    %v247 = vpop.f32.mrb[0].mxu0
    %v248 = vadd.f32 0.0, %v247
    %v249 = vpop.f32.mrb[0].mxu0
    %250 = vmatprep.mubr.f32.mxu0 0.0
    %251 = vmatmul.mubr.f32.gmra.mrb[0].mxu0 %v81
    %v252 = vpop.f32.mrb[0].mxu0
    %v253 = vadd.f32 0.0, %v252
    %v254 = vpop.f32.mrb[0].mxu0
    %255 = vmatprep.mubr.f32.mxu0 0.0
    %256 = vmatmul.mubr.f32.gmra.mrb[0].mxu0 %v84
    %v257 = vpop.f32.mrb[0].mxu0
    %v258 = vadd.f32 0.0, %v257
    %v259 = vpop.f32.mrb[0].mxu0
    %260 = vmatprep.mubr.f32.mxu0 0.0
    %261 = vmatmul.mubr.f32.gmra.mrb[0].mxu0 %v87
    %v262 = vpop.f32.mrb[0].mxu0
    %v263 = vadd.f32 0.0, %v262
    %v264 = vpop.f32.mrb[0].mxu0
    %265 = vmatprep.mubr.f32.mxu0 0.0
    %266 = vmatmul.mubr.f32.gmra.mrb[0].mxu0 %v90
    %v267 = vpop.f32.mrb[0].mxu0
    %v268 = vadd.f32 0.0, %v267
    %v269 = vpop.f32.mrb[0].mxu0
    %270 = vmatprep.mubr.f32.mxu0 0.0
    %271 = vmatmul.mubr.f32.gmra.mrb[0].mxu0 %v93
    %v272 = vpop.f32.mrb[0].mxu0
    %v273 = vadd.f32 0.0, %v272
    %v274 = vpop.f32.mrb[0].mxu0
    %275 = vmatprep.mubr.f32.mxu0 0.0
    %276 = vmatmul.mubr.f32.gmra.mrb[0].mxu0 %v96
    %v277 = vpop.f32.mrb[0].mxu0
    %v278 = vadd.f32 0.0, %v277
    %v279 = vpop.f32.mrb[0].mxu0
    %280 = vmatprep.mubr.f32.mxu0 0.0
    %281 = vmatmul.mubr.f32.gmra.mrb[0].mxu0 %v99
    %v282 = vpop.f32.mrb[0].mxu0
    %v283 = vadd.f32 0.0, %v282
    %v284 = vpop.f32.mrb[0].mxu0
    %285 = vmatprep.mubr.f32.mxu0 0.0
    %286 = vmatmul.mubr.f32.gmra.mrb[0].mxu0 %v102
    %v287 = vpop.f32.mrb[0].mxu0
    %v288 = vadd.f32 0.0, %v287
    %v289 = vpop.f32.mrb[0].mxu0
    %290 = vmatprep.mubr.f32.mxu0 0.0
    %291 = vmatmul.mubr.f32.gmra.mrb[0].mxu0 %v105
    %v292 = vpop.f32.mrb[0].mxu0
    %v293 = vadd.f32 0.0, %v292
    %v294 = vpop.f32.mrb[0].mxu0
    %295 = vmatprep.mubr.f32.mxu0 0.0
    %296 = vmatmul.mubr.f32.gmra.mrb[0].mxu0 %v108
    %v297 = vpop.f32.mrb[0].mxu0
    %v298 = vadd.f32 0.0, %v297
    %v299 = vpop.f32.mrb[0].mxu0
    %300 = vmatprep.mubr.f32.mxu0 0.0
    %301 = vmatmul.mubr.f32.gmra.mrb[0].mxu0 %v111
    %v302 = vpop.f32.mrb[0].mxu0
    %v303 = vadd.f32 0.0, %v302
    %v304 = vpop.f32.mrb[0].mxu0
    %305 = vmatprep.mubr.f32.mxu0 0.0
    %306 = vmatmul.mubr.f32.gmra.mrb[0].mxu0 %v114
    %v307 = vpop.f32.mrb[0].mxu0
    %v308 = vadd.f32 0.0, %v307
    %v309 = vpop.f32.mrb[0].mxu0
    %310 = vmatprep.mubr.f32.mxu0 0.0
    %311 = vmatmul.mubr.f32.gmra.mrb[0].mxu0 %v117
    %v312 = vpop.f32.mrb[0].mxu0
    %v313 = vadd.f32 0.0, %v312
    %v314 = vpop.f32.mrb[0].mxu0
    %315 = vmatprep.mubr.f32.mxu0 0.0
    %316 = vmatmul.mubr.f32.gmra.mrb[0].mxu0 %v120
    %v317 = vpop.f32.mrb[0].mxu0
    %v318 = vadd.f32 0.0, %v317
    %v319 = vpop.f32.mrb[0].mxu0
    %320 = vmatprep.mubr.f32.mxu0 0.0
    %321 = vmatmul.mubr.f32.gmra.mrb[0].mxu0 %v123
    %v322 = vpop.f32.mrb[0].mxu0
    %v323 = vadd.f32 0.0, %v322
    %v324 = vpop.f32.mrb[0].mxu0
    %325 = vmatprep.mubr.f32.mxu0 0.0
    %326 = vmatmul.mubr.f32.gmra.mrb[0].mxu0 %v126
    %v327 = vpop.f32.mrb[0].mxu0
    %v328 = vadd.f32 0.0, %v327
    %v329 = vpop.f32.mrb[0].mxu0
    %330 = vmatprep.mubr.f32.mxu0 0.0
    %331 = vmatmul.mubr.f32.gmra.mrb[0].mxu0 %v129
    %v332 = vpop.f32.mrb[0].mxu0
    %v333 = vadd.f32 0.0, %v332
    %v334 = vpop.f32.mrb[0].mxu0
    %335 = vmatprep.mubr.f32.mxu0 0.0
    %336 = vmatmul.mubr.f32.gmra.mrb[0].mxu0 %v132
    %v337 = vpop.f32.mrb[0].mxu0
    %v338 = vadd.f32 0.0, %v337
    %v339 = vpop.f32.mrb[0].mxu0
    %340 = vmatprep.mubr.f32.mxu0 0.0
    %341 = vmatmul.mubr.f32.gmra.mrb[0].mxu0 %v135
    %v342 = vpop.f32.mrb[0].mxu0
    %v343 = vadd.f32 0.0, %v342
    %v344 = vpop.f32.mrb[0].mxu0
    %345 = vmatprep.mubr.f32.mxu0 0.0
    %346 = vmatmul.mubr.f32.gmra.mrb[0].mxu0 %v138
    %v347 = vpop.f32.mrb[0].mxu0
    %v348 = vadd.f32 0.0, %v347
    %v349 = vpop.f32.mrb[0].mxu0
    %350 = vmatprep.mubr.f32.mxu0 0.0
    %351 = vmatmul.mubr.f32.gmra.mrb[0].mxu0 %v141
    %v352 = vpop.f32.mrb[0].mxu0
    %v353 = vadd.f32 0.0, %v352
    %v354 = vpop.f32.mrb[0].mxu0
    %355 = vmatprep.mubr.f32.mxu0 0.0
    %356 = vmatmul.mubr.f32.gmra.mrb[0].mxu0 %v144
    %v357 = vpop.f32.mrb[0].mxu0
    %v358 = vadd.f32 0.0, %v357
    %v359 = vpop.f32.mrb[0].mxu0
    %360 = vmatprep.mubr.f32.mxu0 0.0
    %361 = vmatmul.mubr.f32.gmra.mrb[0].mxu0 %v147
    %v362 = vpop.f32.mrb[0].mxu0
    %v363 = vadd.f32 0.0, %v362
    %v364 = vpop.f32.mrb[0].mxu0
    %365 = vmatprep.mubr.f32.mxu0 0.0
    %366 = vmatmul.mubr.f32.gmra.mrb[0].mxu0 %v150
    %v367 = vpop.f32.mrb[0].mxu0
    %v368 = vadd.f32 0.0, %v367
    %v369 = vpop.f32.mrb[0].mxu0
    %370 = vmatprep.mubr.f32.mxu0 0.0
    %371 = vmatmul.mubr.f32.gmra.mrb[0].mxu0 %v153
    %v372 = vpop.f32.mrb[0].mxu0
    %v373 = vadd.f32 0.0, %v372
    %v374 = vpop.f32.mrb[0].mxu0
    %375 = vmatprep.mubr.f32.mxu0 0.0
    %376 = vmatmul.mubr.f32.gmra.mrb[0].mxu0 %v156
    %v377 = vpop.f32.mrb[0].mxu0
    %v378 = vadd.f32 0.0, %v377
    %v379 = vpop.f32.mrb[0].mxu0
    %380 = vmatprep.mubr.f32.mxu0 0.0
    %381 = vmatmul.mubr.f32.gmra.mrb[0].mxu0 %v159
    %v382 = vpop.f32.mrb[0].mxu0
    %v383 = vadd.f32 0.0, %v382
    %v384 = vpop.f32.mrb[0].mxu0
    %385 = vdwg.mxu0
    %v386 = vld [vmem:[%s3] sm:$0xff]
    %v387 = vld [vmem:[%s3 + $0x8] sm:$0xff]
    %v388 = vld [vmem:[%s3 + $0x10] sm:$0xff]
    %v389 = vld [vmem:[%s3 + $0x18] sm:$0xff]
    %v390 = vld [vmem:[%s4] sm:$0x1]
    %v392 = vlaneseq
    %v393 = vshrl.u32 %v392, 7
    %v394 = vsub.s32 0, %v393
    %v395 = vrot.slane %v390, %v394
    %v398 = vsel %vm64, %v59, 0
    %400 = vmatprep.subr.mxu0 0.0
    %401 = vmatpush1.msra.mxu0 %v386
    %402 = vmatprep.subr.mxu0 0.0
    %403 = vmatpush1.msra.mxu0 %v387
    %404 = vmatprep.subr.mxu0 0.0
    %405 = vmatpush1.msra.mxu0 %v388
    %406 = vmatprep.subr.mxu0 0.0
    %407 = vmatpush1.msra.mxu0 %v389
    %408 = vmatprep.subr.mxu0 0.0
    %409 = vmatpush1.msra.mxu0 0.0
    %410 = vmatprep.subr.mxu0 0.0
    %411 = vmatpush1.msra.mxu0 0.0
    %412 = vmatprep.subr.mxu0 0.0
    %413 = vmatpush1.msra.mxu0 0.0
    %414 = vmatprep.subr.mxu0 0.0
    %415 = vmatpush1.msra.mxu0 0.0
    %416 = vmatprep.subr.mxu0 0.0
    %417 = vmatpush1.msra.mxu0 0.0
    %418 = vmatprep.subr.mxu0 0.0
    %419 = vmatpush1.msra.mxu0 0.0
    %420 = vmatprep.subr.mxu0 0.0
    %421 = vmatpush1.msra.mxu0 0.0
    %422 = vmatprep.subr.mxu0 0.0
    %423 = vmatpush1.msra.mxu0 0.0
    %424 = vmatprep.subr.mxu0 0.0
    %425 = vmatpush1.msra.mxu0 0.0
    %426 = vmatprep.subr.mxu0 0.0
    %427 = vmatpush1.msra.mxu0 0.0
    %428 = vmatprep.subr.mxu0 0.0
    %429 = vmatpush1.msra.mxu0 0.0
    %430 = vmatprep.subr.mxu0 0.0
    %431 = vmatpush1.msra.mxu0 0.0
    %432 = vmatprep.subr.mxu0 0.0
    %433 = vmatpush1.msra.mxu0 0.0
    %434 = vmatprep.subr.mxu0 0.0
    %435 = vmatpush1.msra.mxu0 0.0
    %436 = vmatprep.subr.mxu0 0.0
    %437 = vmatpush1.msra.mxu0 0.0
    %438 = vmatprep.subr.mxu0 0.0
    %439 = vmatpush1.msra.mxu0 0.0
    %440 = vmatprep.subr.mxu0 0.0
    %441 = vmatpush1.msra.mxu0 0.0
    %442 = vmatprep.subr.mxu0 0.0
    %443 = vmatpush1.msra.mxu0 0.0
    %444 = vmatprep.subr.mxu0 0.0
    %445 = vmatpush1.msra.mxu0 0.0
    %446 = vmatprep.subr.mxu0 0.0
    %447 = vmatpush1.msra.mxu0 0.0
    %448 = vmatprep.subr.mxu0 0.0
    %449 = vmatpush1.msra.mxu0 0.0
    %450 = vmatprep.subr.mxu0 0.0
    %451 = vmatpush1.msra.mxu0 0.0
    %452 = vmatprep.subr.mxu0 0.0
    %453 = vmatpush1.msra.mxu0 0.0
    %454 = vmatprep.subr.mxu0 0.0
    %455 = vmatpush1.msra.mxu0 0.0
    %456 = vmatprep.subr.mxu0 0.0
    %457 = vmatpush1.msra.mxu0 0.0
    %458 = vmatprep.subr.mxu0 0.0
    %459 = vmatpush1.msra.mxu0 0.0
    %460 = vmatprep.subr.mxu0 0.0
    %461 = vmatpush1.msra.mxu0 0.0
    %462 = vmatprep.subr.mxu0 0.0
    %463 = vmatpush1.msra.mxu0 0.0
    %464 = vmatprep.mubr.f32.mxu0 0.0
    %465 = vmatmul.mubr.f32.gmra.mrb[0].mxu0 %v398
    %v466 = vpop.f32.mrb[0].mxu0
    %v467 = vadd.f32 %v395, %v466
    %v468 = vpop.f32.mrb[0].mxu0
    %469 = vdwg.mxu0
    %v472 = vunpack.c.l.s4 1966171168
    %v473 = vunpack.c.0.s8 %v472
    %v474 = vlaneseq
    %v475 = vshrl.u32 %v474, 7
    %v476 = vsub.s32 %v473, %v475
    %v477 = vrot.slane %v467, %v476
    %v478 = vcombine.high %v477, %v477
    %v480 = vunpack.c.l.s4 1966171168
    %v481 = vunpack.c.0.s8 %v480
    %v482 = vlaneseq
    %v483 = vshrl.u32 %v482, 7
    %v484 = vsub.s32 %v481, %v483
    %v485 = vrot.slane %v477, %v484
    %v487 = vunpack.c.l.s4 1966171168
    %v488 = vunpack.c.0.s8 %v487
    %v489 = vlaneseq
    %v490 = vshrl.u32 %v489, 7
    %v491 = vsub.s32 %v488, %v490
    %v492 = vrot.slane %v478, %v491
    %v493 = vlaneseq
    %v494 = vshrl.u32 %v493, 7
    %v495 = vsub.s32 0, %v494
    %v496 = vrot.slane %v485, %v495
    %v497 = vlaneseq
    %v498 = vshrl.u32 %v497, 7
    %v499 = vsub.s32 0, %v498
    %v500 = vrot.slane %v492, %v499
    %v503 = vadd.f32 %v228, %v496
    %v504 = vadd.f32 %v233, %v496
    %v505 = vadd.f32 %v238, %v496
    %v506 = vadd.f32 %v243, %v496
    %v507 = vadd.f32 %v248, %v496
    %v508 = vadd.f32 %v253, %v496
    %v509 = vadd.f32 %v258, %v496
    %v510 = vadd.f32 %v263, %v496
    %v511 = vadd.f32 %v268, %v496
    %v512 = vadd.f32 %v273, %v496
    %v513 = vadd.f32 %v278, %v496
    %v514 = vadd.f32 %v283, %v496
    %v515 = vadd.f32 %v288, %v496
    %v516 = vadd.f32 %v293, %v496
    %v517 = vadd.f32 %v298, %v496
    %v518 = vadd.f32 %v303, %v496
    %v519 = vadd.f32 %v308, %v500
    %v520 = vadd.f32 %v313, %v500
    %v521 = vadd.f32 %v318, %v500
    %v522 = vadd.f32 %v323, %v500
    %v523 = vadd.f32 %v328, %v500
    %v524 = vadd.f32 %v333, %v500
    %v525 = vadd.f32 %v338, %v500
    %v526 = vadd.f32 %v343, %v500
    %v527 = vadd.f32 %v348, %v500
    %v528 = vadd.f32 %v353, %v500
    %v529 = vadd.f32 %v358, %v500
    %v530 = vadd.f32 %v363, %v500
    %v531 = vadd.f32 %v368, %v500
    %v532 = vadd.f32 %v373, %v500
    %v533 = vadd.f32 %v378, %v500
    %v534 = vadd.f32 %v383, %v500
    %v535 = vmax.f32 %v503, 0.0
    %v536 = vmax.f32 %v504, 0.0
    %v537 = vmax.f32 %v505, 0.0
    %v538 = vmax.f32 %v506, 0.0
    %v539 = vmax.f32 %v507, 0.0
    %v540 = vmax.f32 %v508, 0.0
    %v541 = vmax.f32 %v509, 0.0
    %v542 = vmax.f32 %v510, 0.0
    %v543 = vmax.f32 %v511, 0.0
    %v544 = vmax.f32 %v512, 0.0
    %v545 = vmax.f32 %v513, 0.0
    %v546 = vmax.f32 %v514, 0.0
    %v547 = vmax.f32 %v515, 0.0
    %v548 = vmax.f32 %v516, 0.0
    %v549 = vmax.f32 %v517, 0.0
    %v550 = vmax.f32 %v518, 0.0
    %v551 = vmax.f32 %v519, 0.0
    %v552 = vmax.f32 %v520, 0.0
    %v553 = vmax.f32 %v521, 0.0
    %v554 = vmax.f32 %v522, 0.0
    %v555 = vmax.f32 %v523, 0.0
    %v556 = vmax.f32 %v524, 0.0
    %v557 = vmax.f32 %v525, 0.0
    %v558 = vmax.f32 %v526, 0.0
    %v559 = vmax.f32 %v527, 0.0
    %v560 = vmax.f32 %v528, 0.0
    %v561 = vmax.f32 %v529, 0.0
    %v562 = vmax.f32 %v530, 0.0
    %v563 = vmax.f32 %v531, 0.0
    %v564 = vmax.f32 %v532, 0.0
    %v565 = vmax.f32 %v533, 0.0
    %v566 = vmax.f32 %v534, 0.0
    %v567 = vld [vmem:[%s5] sm:$0x1]
    %v569 = vlaneseq
    %v570 = vshrl.u32 %v569, 7
    %v571 = vsub.s32 0, %v570
    %v572 = vrot.slane %v567, %v571
    %v574 = vmul.f32 %v535, %v572
    %v575 = vmul.f32 %v536, %v572
    %v576 = vmul.f32 %v537, %v572
    %v577 = vmul.f32 %v538, %v572
    %v578 = vmul.f32 %v539, %v572
    %v579 = vmul.f32 %v540, %v572
    %v580 = vmul.f32 %v541, %v572
    %v581 = vmul.f32 %v542, %v572
    %v582 = vmul.f32 %v543, %v572
    %v583 = vmul.f32 %v544, %v572
    %v584 = vmul.f32 %v545, %v572
    %v585 = vmul.f32 %v546, %v572
    %v586 = vmul.f32 %v547, %v572
    %v587 = vmul.f32 %v548, %v572
    %v588 = vmul.f32 %v549, %v572
    %v589 = vmul.f32 %v550, %v572
    %v590 = vmul.f32 %v551, %v572
    %v591 = vmul.f32 %v552, %v572
    %v592 = vmul.f32 %v553, %v572
    %v593 = vmul.f32 %v554, %v572
    %v594 = vmul.f32 %v555, %v572
    %v595 = vmul.f32 %v556, %v572
    %v596 = vmul.f32 %v557, %v572
    %v597 = vmul.f32 %v558, %v572
    %v598 = vmul.f32 %v559, %v572
    %v599 = vmul.f32 %v560, %v572
    %v600 = vmul.f32 %v561, %v572
    %v601 = vmul.f32 %v562, %v572
    %v602 = vmul.f32 %v563, %v572
    %v603 = vmul.f32 %v564, %v572
    %v604 = vmul.f32 %v565, %v572
    %v605 = vmul.f32 %v566, %v572
    %606 = vadd.xlane.f32.xlu0 %v574
    %v607 = vpop.xlane.xlu0 %606
    %608 = vadd.xlane.f32.xlu0 %v575
    %v609 = vpop.xlane.xlu0 %608
    %610 = vadd.xlane.f32.xlu0 %v576
    %v611 = vpop.xlane.xlu0 %610
    %612 = vadd.xlane.f32.xlu0 %v577
    %v613 = vpop.xlane.xlu0 %612
    %614 = vadd.xlane.f32.xlu0 %v578
    %v615 = vpop.xlane.xlu0 %614
    %616 = vadd.xlane.f32.xlu0 %v579
    %v617 = vpop.xlane.xlu0 %616
    %618 = vadd.xlane.f32.xlu0 %v580
    %v619 = vpop.xlane.xlu0 %618
    %620 = vadd.xlane.f32.xlu0 %v581
    %v621 = vpop.xlane.xlu0 %620
    %622 = vadd.xlane.f32.xlu0 %v582
    %v623 = vpop.xlane.xlu0 %622
    %624 = vadd.xlane.f32.xlu0 %v583
    %v625 = vpop.xlane.xlu0 %624
    %626 = vadd.xlane.f32.xlu0 %v584
    %v627 = vpop.xlane.xlu0 %626
    %628 = vadd.xlane.f32.xlu0 %v585
    %v629 = vpop.xlane.xlu0 %628
    %630 = vadd.xlane.f32.xlu0 %v586
    %v631 = vpop.xlane.xlu0 %630
    %632 = vadd.xlane.f32.xlu0 %v587
    %v633 = vpop.xlane.xlu0 %632
    %634 = vadd.xlane.f32.xlu0 %v588
    %v635 = vpop.xlane.xlu0 %634
    %636 = vadd.xlane.f32.xlu0 %v589
    %v637 = vpop.xlane.xlu0 %636
    %638 = vadd.xlane.f32.xlu0 %v590
    %v639 = vpop.xlane.xlu0 %638
    %640 = vadd.xlane.f32.xlu0 %v591
    %v641 = vpop.xlane.xlu0 %640
    %642 = vadd.xlane.f32.xlu0 %v592
    %v643 = vpop.xlane.xlu0 %642
    %644 = vadd.xlane.f32.xlu0 %v593
    %v645 = vpop.xlane.xlu0 %644
    %646 = vadd.xlane.f32.xlu0 %v594
    %v647 = vpop.xlane.xlu0 %646
    %648 = vadd.xlane.f32.xlu0 %v595
    %v649 = vpop.xlane.xlu0 %648
    %650 = vadd.xlane.f32.xlu0 %v596
    %v651 = vpop.xlane.xlu0 %650
    %652 = vadd.xlane.f32.xlu0 %v597
    %v653 = vpop.xlane.xlu0 %652
    %654 = vadd.xlane.f32.xlu0 %v598
    %v655 = vpop.xlane.xlu0 %654
    %656 = vadd.xlane.f32.xlu0 %v599
    %v657 = vpop.xlane.xlu0 %656
    %658 = vadd.xlane.f32.xlu0 %v600
    %v659 = vpop.xlane.xlu0 %658
    %660 = vadd.xlane.f32.xlu0 %v601
    %v661 = vpop.xlane.xlu0 %660
    %662 = vadd.xlane.f32.xlu0 %v602
    %v663 = vpop.xlane.xlu0 %662
    %664 = vadd.xlane.f32.xlu0 %v603
    %v665 = vpop.xlane.xlu0 %664
    %666 = vadd.xlane.f32.xlu0 %v604
    %v667 = vpop.xlane.xlu0 %666
    %668 = vadd.xlane.f32.xlu0 %v605
    %v669 = vpop.xlane.xlu0 %668
    %v670 = vlaneseq
    %v671 = vand.u32 %v670, 127
    %vm672 = vcmp.lt.s32.totalorder %v671, 16
    %v705 = vlaneseq
    %v706 = vshrl.u32 %v705, 7
    %v707 = vsub.s32 %v671, %v706
    %v708 = vrot.slane %v607, %v707
    %v709 = vadd.s32 %v671, 4294967288
    %v710 = vlaneseq
    %v711 = vshrl.u32 %v710, 7
    %v712 = vsub.s32 %v709, %v711
    %v713 = vrot.slane %v609, %v712
    %vm714 = vcmask 130112
    %v715 = vsel %vm714, %v713, %v708
    %v716 = vadd.s32 %v671, 4294967280
    %v717 = vlaneseq
    %v718 = vshrl.u32 %v717, 7
    %v719 = vsub.s32 %v716, %v718
    %v720 = vrot.slane %v611, %v719
    %vm721 = vcmask 195712
    %v722 = vsel %vm721, %v720, %v715
    %v723 = vadd.s32 %v671, 4294967272
    %v724 = vlaneseq
    %v725 = vshrl.u32 %v724, 7
    %v726 = vsub.s32 %v723, %v725
    %v727 = vrot.slane %v613, %v726
    %vm728 = vcmask 261312
    %v729 = vsel %vm728, %v727, %v722
    %v730 = vadd.s32 %v671, 4294967264
    %v731 = vlaneseq
    %v732 = vshrl.u32 %v731, 7
    %v733 = vsub.s32 %v730, %v732
    %v734 = vrot.slane %v615, %v733
    %vm735 = vcmask 326912
    %v736 = vsel %vm735, %v734, %v729
    %v737 = vadd.s32 %v671, 4294967256
    %v738 = vlaneseq
    %v739 = vshrl.u32 %v738, 7
    %v740 = vsub.s32 %v737, %v739
    %v741 = vrot.slane %v617, %v740
    %vm742 = vcmask 392512
    %v743 = vsel %vm742, %v741, %v736
    %v744 = vadd.s32 %v671, 4294967248
    %v745 = vlaneseq
    %v746 = vshrl.u32 %v745, 7
    %v747 = vsub.s32 %v744, %v746
    %v748 = vrot.slane %v619, %v747
    %vm749 = vcmask 458112
    %v750 = vsel %vm749, %v748, %v743
    %v751 = vadd.s32 %v671, 4294967240
    %v752 = vlaneseq
    %v753 = vshrl.u32 %v752, 7
    %v754 = vsub.s32 %v751, %v753
    %v755 = vrot.slane %v621, %v754
    %vm756 = vcmask 523712
    %v757 = vsel %vm756, %v755, %v750
    %v758 = vadd.s32 %v671, 4294967232
    %v759 = vlaneseq
    %v760 = vshrl.u32 %v759, 7
    %v761 = vsub.s32 %v758, %v760
    %v762 = vrot.slane %v623, %v761
    %vm763 = vcmask 589312
    %v764 = vsel %vm763, %v762, %v757
    %v765 = vadd.s32 %v671, 4294967224
    %v766 = vlaneseq
    %v767 = vshrl.u32 %v766, 7
    %v768 = vsub.s32 %v765, %v767
    %v769 = vrot.slane %v625, %v768
    %vm770 = vcmask 654912
    %v771 = vsel %vm770, %v769, %v764
    %v772 = vadd.s32 %v671, 4294967216
    %v773 = vlaneseq
    %v774 = vshrl.u32 %v773, 7
    %v775 = vsub.s32 %v772, %v774
    %v776 = vrot.slane %v627, %v775
    %vm777 = vcmask 720512
    %v778 = vsel %vm777, %v776, %v771
    %v779 = vadd.s32 %v671, 4294967208
    %v780 = vlaneseq
    %v781 = vshrl.u32 %v780, 7
    %v782 = vsub.s32 %v779, %v781
    %v783 = vrot.slane %v629, %v782
    %vm784 = vcmask 786112
    %v785 = vsel %vm784, %v783, %v778
    %v786 = vadd.s32 %v671, 4294967200
    %v787 = vlaneseq
    %v788 = vshrl.u32 %v787, 7
    %v789 = vsub.s32 %v786, %v788
    %v790 = vrot.slane %v631, %v789
    %vm791 = vcmask 851712
    %v792 = vsel %vm791, %v790, %v785
    %v793 = vadd.s32 %v671, 4294967192
    %v794 = vlaneseq
    %v795 = vshrl.u32 %v794, 7
    %v796 = vsub.s32 %v793, %v795
    %v797 = vrot.slane %v633, %v796
    %vm798 = vcmask 917312
    %v799 = vsel %vm798, %v797, %v792
    %v800 = vadd.s32 %v671, 4294967184
    %v801 = vlaneseq
    %v802 = vshrl.u32 %v801, 7
    %v803 = vsub.s32 %v800, %v802
    %v804 = vrot.slane %v635, %v803
    %vm805 = vcmask 982912
    %v806 = vsel %vm805, %v804, %v799
    %v807 = vadd.s32 %v671, 4294967176
    %v808 = vlaneseq
    %v809 = vshrl.u32 %v808, 7
    %v810 = vsub.s32 %v807, %v809
    %v811 = vrot.slane %v637, %v810
    %vm812 = vcmask 1048512
    %v813 = vsel %vm812, %v811, %v806
    %v814 = vlaneseq
    %v815 = vshrl.u32 %v814, 7
    %v816 = vsub.s32 %v671, %v815
    %v817 = vrot.slane %v639, %v816
    %v818 = vlaneseq
    %v819 = vshrl.u32 %v818, 7
    %v820 = vsub.s32 %v709, %v819
    %v821 = vrot.slane %v641, %v820
    %v822 = vsel %vm714, %v821, %v817
    %v823 = vlaneseq
    %v824 = vshrl.u32 %v823, 7
    %v825 = vsub.s32 %v716, %v824
    %v826 = vrot.slane %v643, %v825
    %v827 = vsel %vm721, %v826, %v822
    %v828 = vlaneseq
    %v829 = vshrl.u32 %v828, 7
    %v830 = vsub.s32 %v723, %v829
    %v831 = vrot.slane %v645, %v830
    %v832 = vsel %vm728, %v831, %v827
    %v833 = vlaneseq
    %v834 = vshrl.u32 %v833, 7
    %v835 = vsub.s32 %v730, %v834
    %v836 = vrot.slane %v647, %v835
    %v837 = vsel %vm735, %v836, %v832
    %v838 = vlaneseq
    %v839 = vshrl.u32 %v838, 7
    %v840 = vsub.s32 %v737, %v839
    %v841 = vrot.slane %v649, %v840
    %v842 = vsel %vm742, %v841, %v837
    %v843 = vlaneseq
    %v844 = vshrl.u32 %v843, 7
    %v845 = vsub.s32 %v744, %v844
    %v846 = vrot.slane %v651, %v845
    %v847 = vsel %vm749, %v846, %v842
    %v848 = vlaneseq
    %v849 = vshrl.u32 %v848, 7
    %v850 = vsub.s32 %v751, %v849
    %v851 = vrot.slane %v653, %v850
    %v852 = vsel %vm756, %v851, %v847
    %v853 = vlaneseq
    %v854 = vshrl.u32 %v853, 7
    %v855 = vsub.s32 %v758, %v854
    %v856 = vrot.slane %v655, %v855
    %v857 = vsel %vm763, %v856, %v852
    %v858 = vlaneseq
    %v859 = vshrl.u32 %v858, 7
    %v860 = vsub.s32 %v765, %v859
    %v861 = vrot.slane %v657, %v860
    %v862 = vsel %vm770, %v861, %v857
    %v863 = vlaneseq
    %v864 = vshrl.u32 %v863, 7
    %v865 = vsub.s32 %v772, %v864
    %v866 = vrot.slane %v659, %v865
    %v867 = vsel %vm777, %v866, %v862
    %v868 = vlaneseq
    %v869 = vshrl.u32 %v868, 7
    %v870 = vsub.s32 %v779, %v869
    %v871 = vrot.slane %v661, %v870
    %v872 = vsel %vm784, %v871, %v867
    %v873 = vlaneseq
    %v874 = vshrl.u32 %v873, 7
    %v875 = vsub.s32 %v786, %v874
    %v876 = vrot.slane %v663, %v875
    %v877 = vsel %vm791, %v876, %v872
    %v878 = vlaneseq
    %v879 = vshrl.u32 %v878, 7
    %v880 = vsub.s32 %v793, %v879
    %v881 = vrot.slane %v665, %v880
    %v882 = vsel %vm798, %v881, %v877
    %v883 = vlaneseq
    %v884 = vshrl.u32 %v883, 7
    %v885 = vsub.s32 %v800, %v884
    %v886 = vrot.slane %v667, %v885
    %v887 = vsel %vm805, %v886, %v882
    %v888 = vlaneseq
    %v889 = vshrl.u32 %v888, 7
    %v890 = vsub.s32 %v807, %v889
    %v891 = vrot.slane %v669, %v890
    %v892 = vsel %vm812, %v891, %v887
    %vm893 = vcmask 1041409
    %v894 = vsel %vm893, %v892, %v813
    %v896 = vsel %vm672, %v894, -inf
    %vm897 = vcmask 1041408
    %v898 = vsel %vm897, %v896, -inf
    %899 = vmax.xlane.f32.xlu0 %v898
    %v900 = vpop.xlane.xlu0 %899
    %v901 = vsub.f32 %v896, %v900
    %v902 = vmul.f32 %v901, 1.442695
    %v903 = vpow.pop %v902
    %v904 = vsel %vm897, %v903, 0.0
    %905 = vadd.xlane.f32.xlu0 %v904
    %v906 = vpop.xlane.xlu0 %905
    %v907 = vrcp.pop %v906
    %v908 = vmul.f32 %v903, %v907
    %v911 = vunpack.c.l.s4 1966171168
    %v912 = vunpack.c.0.s8 %v911
    %v913 = vlaneseq
    %v914 = vshrl.u32 %v913, 7
    %v915 = vsub.s32 %v912, %v914
    %v916 = vrot.slane %v908, %v915
    %v917 = vcombine.high %v916, %v916
    %v919 = vunpack.c.l.s4 1966171168
    %v920 = vunpack.c.0.s8 %v919
    %v921 = vlaneseq
    %v922 = vshrl.u32 %v921, 7
    %v923 = vsub.s32 %v920, %v922
    %v924 = vrot.slane %v916, %v923
    %v926 = vunpack.c.l.s4 1966171168
    %v927 = vunpack.c.0.s8 %v926
    %v928 = vlaneseq
    %v929 = vshrl.u32 %v928, 7
    %v930 = vsub.s32 %v927, %v929
    %v931 = vrot.slane %v917, %v930
    %934 = vmatprep.subr.mxu0 0.0
    %935 = vmatpush1.msra.mxu0 %v27
    %936 = vmatprep.subr.mxu0 0.0
    %937 = vmatpush1.msra.mxu0 %v28
    %938 = vmatprep.subr.mxu0 0.0
    %939 = vmatpush1.msra.mxu0 %v29
    %940 = vmatprep.subr.mxu0 0.0
    %941 = vmatpush1.msra.mxu0 %v30
    %942 = vmatprep.subr.mxu0 0.0
    %943 = vmatpush1.msra.mxu0 %v31
    %944 = vmatprep.subr.mxu0 0.0
    %945 = vmatpush1.msra.mxu0 %v32
    %946 = vmatprep.subr.mxu0 0.0
    %947 = vmatpush1.msra.mxu0 %v33
    %948 = vmatprep.subr.mxu0 0.0
    %949 = vmatpush1.msra.mxu0 %v34
    %950 = vmatprep.subr.mxu0 0.0
    %951 = vmatpush1.msra.mxu0 %v35
    %952 = vmatprep.subr.mxu0 0.0
    %953 = vmatpush1.msra.mxu0 %v36
    %954 = vmatprep.subr.mxu0 0.0
    %955 = vmatpush1.msra.mxu0 %v37
    %956 = vmatprep.subr.mxu0 0.0
    %957 = vmatpush1.msra.mxu0 %v38
    %958 = vmatprep.subr.mxu0 0.0
    %959 = vmatpush1.msra.mxu0 %v39
    %960 = vmatprep.subr.mxu0 0.0
    %961 = vmatpush1.msra.mxu0 %v40
    %962 = vmatprep.subr.mxu0 0.0
    %963 = vmatpush1.msra.mxu0 %v41
    %964 = vmatprep.subr.mxu0 0.0
    %965 = vmatpush1.msra.mxu0 %v42
    %966 = vmatprep.subr.mxu0 0.0
    %967 = vmatpush1.msra.mxu0 0.0
    %968 = vmatprep.subr.mxu0 0.0
    %969 = vmatpush1.msra.mxu0 0.0
    %970 = vmatprep.subr.mxu0 0.0
    %971 = vmatpush1.msra.mxu0 0.0
    %972 = vmatprep.subr.mxu0 0.0
    %973 = vmatpush1.msra.mxu0 0.0
    %974 = vmatprep.subr.mxu0 0.0
    %975 = vmatpush1.msra.mxu0 0.0
    %976 = vmatprep.subr.mxu0 0.0
    %977 = vmatpush1.msra.mxu0 0.0
    %978 = vmatprep.subr.mxu0 0.0
    %979 = vmatpush1.msra.mxu0 0.0
    %980 = vmatprep.subr.mxu0 0.0
    %981 = vmatpush1.msra.mxu0 0.0
    %982 = vmatprep.subr.mxu0 0.0
    %983 = vmatpush1.msra.mxu0 0.0
    %984 = vmatprep.subr.mxu0 0.0
    %985 = vmatpush1.msra.mxu0 0.0
    %986 = vmatprep.subr.mxu0 0.0
    %987 = vmatpush1.msra.mxu0 0.0
    %988 = vmatprep.subr.mxu0 0.0
    %989 = vmatpush1.msra.mxu0 0.0
    %990 = vmatprep.subr.mxu0 0.0
    %991 = vmatpush1.msra.mxu0 0.0
    %992 = vmatprep.subr.mxu0 0.0
    %993 = vmatpush1.msra.mxu0 0.0
    %994 = vmatprep.subr.mxu0 0.0
    %995 = vmatpush1.msra.mxu0 0.0
    %996 = vmatprep.subr.mxu0 0.0
    %997 = vmatpush1.msra.mxu0 0.0
    %998 = vmatprep.mubr.f32.mxu0 0.0
    %999 = vmatmul.mubr.f32.gmra.mrb[0].mxu0 %v924
    %v1000 = vpop.f32.mrb[0].mxu0
    %v1001 = vadd.f32 0.0, %v1000
    %v1002 = vpop.f32.mrb[0].mxu0
    %1003 = vdwg.mxu0
    %1004 = vmatprep.subr.mxu0 0.0
    %1005 = vmatpush1.msra.mxu0 %v43
    %1006 = vmatprep.subr.mxu0 0.0
    %1007 = vmatpush1.msra.mxu0 %v44
    %1008 = vmatprep.subr.mxu0 0.0
    %1009 = vmatpush1.msra.mxu0 %v45
    %1010 = vmatprep.subr.mxu0 0.0
    %1011 = vmatpush1.msra.mxu0 %v46
    %1012 = vmatprep.subr.mxu0 0.0
    %1013 = vmatpush1.msra.mxu0 %v47
    %1014 = vmatprep.subr.mxu0 0.0
    %1015 = vmatpush1.msra.mxu0 %v48
    %1016 = vmatprep.subr.mxu0 0.0
    %1017 = vmatpush1.msra.mxu0 %v49
    %1018 = vmatprep.subr.mxu0 0.0
    %1019 = vmatpush1.msra.mxu0 %v50
    %1020 = vmatprep.subr.mxu0 0.0
    %1021 = vmatpush1.msra.mxu0 %v51
    %1022 = vmatprep.subr.mxu0 0.0
    %1023 = vmatpush1.msra.mxu0 %v52
    %1024 = vmatprep.subr.mxu0 0.0
    %1025 = vmatpush1.msra.mxu0 %v53
    %1026 = vmatprep.subr.mxu0 0.0
    %1027 = vmatpush1.msra.mxu0 %v54
    %1028 = vmatprep.subr.mxu0 0.0
    %1029 = vmatpush1.msra.mxu0 %v55
    %1030 = vmatprep.subr.mxu0 0.0
    %1031 = vmatpush1.msra.mxu0 %v56
    %1032 = vmatprep.subr.mxu0 0.0
    %1033 = vmatpush1.msra.mxu0 %v57
    %1034 = vmatprep.subr.mxu0 0.0
    %1035 = vmatpush1.msra.mxu0 %v58
    %1036 = vmatprep.subr.mxu0 0.0
    %1037 = vmatpush1.msra.mxu0 0.0
    %1038 = vmatprep.subr.mxu0 0.0
    %1039 = vmatpush1.msra.mxu0 0.0
    %1040 = vmatprep.subr.mxu0 0.0
    %1041 = vmatpush1.msra.mxu0 0.0
    %1042 = vmatprep.subr.mxu0 0.0
    %1043 = vmatpush1.msra.mxu0 0.0
    %1044 = vmatprep.subr.mxu0 0.0
    %1045 = vmatpush1.msra.mxu0 0.0
    %1046 = vmatprep.subr.mxu0 0.0
    %1047 = vmatpush1.msra.mxu0 0.0
    %1048 = vmatprep.subr.mxu0 0.0
    %1049 = vmatpush1.msra.mxu0 0.0
    %1050 = vmatprep.subr.mxu0 0.0
    %1051 = vmatpush1.msra.mxu0 0.0
    %1052 = vmatprep.subr.mxu0 0.0
    %1053 = vmatpush1.msra.mxu0 0.0
    %1054 = vmatprep.subr.mxu0 0.0
    %1055 = vmatpush1.msra.mxu0 0.0
    %1056 = vmatprep.subr.mxu0 0.0
    %1057 = vmatpush1.msra.mxu0 0.0
    %1058 = vmatprep.subr.mxu0 0.0
    %1059 = vmatpush1.msra.mxu0 0.0
    %1060 = vmatprep.subr.mxu0 0.0
    %1061 = vmatpush1.msra.mxu0 0.0
    %1062 = vmatprep.subr.mxu0 0.0
    %1063 = vmatpush1.msra.mxu0 0.0
    %1064 = vmatprep.subr.mxu0 0.0
    %1065 = vmatpush1.msra.mxu0 0.0
    %1066 = vmatprep.subr.mxu0 0.0
    %1067 = vmatpush1.msra.mxu0 0.0
    %1068 = vmatprep.mubr.f32.mxu0 0.0
    %1069 = vmatmul.mubr.f32.gmra.mrb[0].mxu0 %v931
    %v1070 = vpop.f32.mrb[0].mxu0
    %v1071 = vadd.f32 0.0, %v1070
    %v1072 = vpop.f32.mrb[0].mxu0
    %1073 = vdwg.mxu0
    %v1076 = vrot.slane %v1071, 7
    %v1077 = vsel %vm893, %v1076, %v1001
    %vm1079 = vcmask 254976
    %1080 = vst.msk [vmem:[#allocation2] sm:$0x3] %vm1079, %v1077
    %1081 = vst [vmem:[#allocation4] sm:$0x3] %v908
    // Predicated region
    $region26: #{tpu_custom_call.1} parent=1 // pred_check
      _
    $region27: #{tpu_custom_call.1} parent=1 // pred_check_branch
      %1083 = sbr.rel (0) target = $region29
    $region28: #{tpu_custom_call.1} parent=1 // pred_region
      %s1085 = ssub.s32 32, 32
      %1086 = vsyncadd [#allocation3], %s1085
      %s1088 = sshll.u32 [#allocation2], 4
      %s1089 = int_to_ptr.vmem [resolvable:$true] %s1088
      %1091 = dma.vmem_to_hbm [thread:$0]  %s1089, 32, %s6, [#allocation3]
    $region29: #{tpu_custom_call.1} parent=1 // pred_fallthru
      _
    // Predicated region
    $region30: #{tpu_custom_call.1} parent=1 // pred_check
      _
    $region31: #{tpu_custom_call.1} parent=1 // pred_check_branch
      %1093 = sbr.rel (0) target = $region33
    $region32: #{tpu_custom_call.1} parent=1 // pred_region
      %s1095 = ssub.s32 32, 32
      %1096 = vsyncadd [#allocation5], %s1095
      %s1098 = sshll.u32 [#allocation4], 4
      %s1099 = int_to_ptr.vmem [resolvable:$true] %s1098
      %1101 = dma.vmem_to_hbm [thread:$0]  %s1099, 32, %s7, [#allocation5]
    $region33: #{tpu_custom_call.1} parent=1 // pred_fallthru
      _
    // Predicated region
    $region34: #{tpu_custom_call.1} parent=1 // pred_check
      _
    $region35: #{tpu_custom_call.1} parent=1 // pred_check_branch
      %1103 = sbr.rel (0) target = $region37
    $region36: #{tpu_custom_call.1} parent=1 // pred_region
      %1104 = dma.done [#allocation3], 32
    $region37: #{tpu_custom_call.1} parent=1 // pred_fallthru
      _
    // Predicated region
    $region38: #{tpu_custom_call.1} parent=1 // pred_check
      _
    $region39: #{tpu_custom_call.1} parent=1 // pred_check_branch
      %1106 = sbr.rel (0) target = $region41
    $region40: #{tpu_custom_call.1} parent=1 // pred_region
      %1107 = dma.done [#allocation5], 32
    $region41: #{tpu_custom_call.1} parent=1 // pred_fallthru
      _
    %1108 = vsyncpa [#allocation3], 1
    %1109 = vsyncpa [#allocation5], 1

</llo_original>
